<compile_context>
chip_gen: v6e
topology: v6e:2x2x1
jax: 0.10.0
libtpu: 0.0.40
codegen_flags: <defaults>
</compile_context>

<pallas_src>
import functools

import jax
import jax.numpy as jnp
from jax import lax
from jax.experimental import pallas as pl
from jax.experimental.pallas import tpu as pltpu

LANE = 128      # vreg lane width (last dim)
SUBLANE = 8     # f32 sublane count (second-to-last dim)


def _round_up(x, m):
    return ((x + m - 1) // m) * m


# ----------------------------------------------------------------------------
# Kernel: fused {image, text} x {encode, project, L2-normalize}
# ----------------------------------------------------------------------------
# (B, K) contracted with (N, K) along K -> (B, N); consumes the native
# nn.Linear (out, in) weight layout directly on the MXU (no transpose copy).
_CONTRACT_LAST = (((1,), (1,)), ((), ()))


def _clip_fused_kernel(xi_ref, xt_ref, wie_ref, wte_ref, wip_ref, wtp_ref,
                       if_ref, tf_ref, ie_ref, te_ref):
    def encode_project_normalize(x, w_enc, w_proj, feat_ref, emb_ref):
        # encoder: (Bp, Kp) x (Dp, Kp) -> (Bp, Dp), bf16 operands, f32 acc
        feat = lax.dot_general(x, w_enc, _CONTRACT_LAST,
                               preferred_element_type=jnp.float32)
        # projection: (Bp, Dp) x (Ep, Dp) -> (Bp, Ep)
        emb = lax.dot_general(feat.astype(jnp.bfloat16), w_proj,
                              _CONTRACT_LAST,
                              preferred_element_type=jnp.float32)
        # F.normalize(p=2, dim=1, eps=1e-12): x / max(||x||, eps)
        # rsqrt(max(sq, eps^2)) == 1 / max(norm, eps); EUP slot, no divide.
        sq = jnp.sum(emb * emb, axis=1, keepdims=True)
        inv = lax.rsqrt(jnp.maximum(sq, 1e-24))
        feat_ref[...] = feat            # f32, lane-dense (padded to 128)
        emb_ref[...] = emb * inv        # f32, lane-dense (padded to 128)

    encode_project_normalize(xi_ref[...], wie_ref[...], wip_ref[...],
                             if_ref, ie_ref)
    encode_project_normalize(xt_ref[...], wte_ref[...], wtp_ref[...],
                             tf_ref, te_ref)


# ----------------------------------------------------------------------------
# Parameters
# ----------------------------------------------------------------------------
def init_params(key, *, image_in_dim, text_in_dim, image_dim, text_dim,
                embedding_dim):
    """Logical params, PyTorch nn.Linear layout (out_features, in_features)."""
    k1, k2, k3, k4 = jax.random.split(key, 4)

    def lin_w(k, out_f, in_f):
        bound = 1.0 / float(in_f) ** 0.5
        return jax.random.uniform(k, (out_f, in_f), jnp.float32, -bound, bound)

    return dict(
        image_encoder_w=lin_w(k1, image_dim, image_in_dim),
        text_encoder_w=lin_w(k2, text_dim, text_in_dim),
        image_projection_w=lin_w(k3, embedding_dim, image_dim),
        text_projection_w=lin_w(k4, embedding_dim, text_dim),
    )


def prepare_params(params):
    """One-time conversion to the kernel layout: zero-pad (out, in) to lane
    multiples (padding contributes nothing to the math) and cast to bf16."""
    def pad_cast(w):
        o, i = w.shape
        return jnp.pad(w, ((0, _round_up(o, LANE) - o),
                           (0, _round_up(i, LANE) - i))).astype(jnp.bfloat16)

    return {k: pad_cast(v) for k, v in params.items()}


# ----------------------------------------------------------------------------
# Forward
# ----------------------------------------------------------------------------
def clip_forward(kparams, image, text, *, image_dim, text_dim, embedding_dim):
    B = image.shape[0]
    Bp = _round_up(B, SUBLANE)

    w_ie = kparams["image_encoder_w"]      # (Dp_i, Kip) bf16
    w_te = kparams["text_encoder_w"]       # (Dp_t, Ktp) bf16
    w_ip = kparams["image_projection_w"]   # (Ep,  Dp_i) bf16
    w_tp = kparams["text_projection_w"]    # (Ep,  Dp_t) bf16

    def pad_activation(x2d, kp):
        b, k = x2d.shape
        return jnp.pad(x2d, ((0, Bp - b), (0, kp - k))).astype(jnp.bfloat16)

    xi = pad_activation(image.reshape(B, -1), w_ie.shape[1])  # NCHW -> (B, CHW)
    xt = pad_activation(text.reshape(B, -1), w_te.shape[1])   # (B, S*Dtok)

    vmem = pl.BlockSpec(memory_space=pltpu.VMEM)
    img_feat, txt_feat, img_emb, txt_emb = pl.pallas_call(
        _clip_fused_kernel,
        out_shape=(
            jax.ShapeDtypeStruct((Bp, w_ie.shape[0]), jnp.float32),
            jax.ShapeDtypeStruct((Bp, w_te.shape[0]), jnp.float32),
            jax.ShapeDtypeStruct((Bp, w_ip.shape[0]), jnp.float32),
            jax.ShapeDtypeStruct((Bp, w_tp.shape[0]), jnp.float32),
        ),
        in_specs=[vmem] * 6,
        out_specs=(vmem,) * 4,
    )(xi, xt, w_ie, w_te, w_ip, w_tp)

    return dict(
        image_features=img_feat[:B, :image_dim],
        text_features=txt_feat[:B, :text_dim],
        image_embedding=img_emb[:B, :embedding_dim],
        text_embedding=txt_emb[:B, :embedding_dim],
    )


# ----------------------------------------------------------------------------
# Main
# ----------------------------------------------------------------------------
if __name__ == "__main__":
    key = jax.random.PRNGKey(0)
    k_img, k_txt, k_par = jax.random.split(key, 3)

    # small shapes consistent with the module's forward
    B, C, H, W = 2, 4, 16, 16          # image: NCHW
    S, DTOK = 8, 32                    # text: (B, S, DTOK)
    IMAGE_DIM, TEXT_DIM, EMB_DIM = 32, 32, 32

    image = jax.random.normal(k_img, (B, C, H, W), jnp.float32)
    text = jax.random.normal(k_txt, (B, S, DTOK), jnp.float32)

    params = init_params(
        k_par,
        image_in_dim=C * H * W,
        text_in_dim=S * DTOK,
        image_dim=IMAGE_DIM,
        text_dim=TEXT_DIM,
        embedding_dim=EMB_DIM,
    )
    kparams = prepare_params(params)   # one-time: pad + bf16 cast

    fwd = jax.jit(
        functools.partial(clip_forward, image_dim=IMAGE_DIM,
                          text_dim=TEXT_DIM, embedding_dim=EMB_DIM))
    out = fwd(kparams, image, text)
    out = jax.tree_util.tree_map(jax.block_until_ready, out)

    # shape checks
    assert out["image_features"].shape == (B, IMAGE_DIM)
    assert out["text_features"].shape == (B, TEXT_DIM)
    assert out["image_embedding"].shape == (B, EMB_DIM)
    assert out["text_embedding"].shape == (B, EMB_DIM)

    # embeddings are unit-norm along dim=1 (f32 norm math; rsqrt on EUP)
    img_norms = jnp.linalg.norm(out["image_embedding"], axis=1)
    txt_norms = jnp.linalg.norm(out["text_embedding"], axis=1)
    assert bool(jnp.allclose(img_norms, 1.0, atol=1e-3))
    assert bool(jnp.allclose(txt_norms, 1.0, atol=1e-3))

    # pure-JAX f32 reference (bf16-matmul tolerance)
    def l2n(x):
        n = jnp.sqrt(jnp.sum(x * x, axis=1, keepdims=True))
        return x / jnp.maximum(n, 1e-12)

    img_flat = image.reshape(B, -1)
    txt_flat = text.reshape(B, -1)
    ref_if = img_flat @ params["image_encoder_w"].T
    ref_tf = txt_flat @ params["text_encoder_w"].T
    ref_ie = l2n(ref_if @ params["image_projection_w"].T)
    ref_te = l2n(ref_tf @ params["text_projection_w"].T)

    assert bool(jnp.allclose(out["image_features"], ref_if, atol=5e-2, rtol=5e-2))
    assert bool(jnp.allclose(out["text_features"], ref_tf, atol=5e-2, rtol=5e-2))
    assert bool(jnp.allclose(out["image_embedding"], ref_ie, atol=5e-2, rtol=5e-2))
    assert bool(jnp.allclose(out["text_embedding"], ref_te, atol=5e-2, rtol=5e-2))

    print("KERNEL_OK")
</pallas_src>

<mosaic_0001>
module attributes {stable_mosaic.version = 11 : i64} {
  func.func @_clip_fused_kernel(%arg0: memref<8x1024xbf16, #tpu.memory_space<vmem>>, %arg1: memref<8x256xbf16, #tpu.memory_space<vmem>>, %arg2: memref<128x1024xbf16, #tpu.memory_space<vmem>>, %arg3: memref<128x256xbf16, #tpu.memory_space<vmem>>, %arg4: memref<128x128xbf16, #tpu.memory_space<vmem>>, %arg5: memref<128x128xbf16, #tpu.memory_space<vmem>>, %arg6: memref<8x128xf32, #tpu.memory_space<vmem>>, %arg7: memref<8x128xf32, #tpu.memory_space<vmem>>, %arg8: memref<8x128xf32, #tpu.memory_space<vmem>>, %arg9: memref<8x128xf32, #tpu.memory_space<vmem>>) attributes {dimension_semantics = [], scalar_prefetch = 0 : i64, scratch_operands = 0 : i64, tpu.core_type = #tpu.core_type<tc>} {
    %c0 = arith.constant 0 : index
    %c0_0 = arith.constant 0 : index
    %0 = vector.load %arg0[%c0, %c0_0] : memref<8x1024xbf16, #tpu.memory_space<vmem>>, vector<8x1024xbf16>
    %c0_1 = arith.constant 0 : index
    %c0_2 = arith.constant 0 : index
    %1 = vector.load %arg2[%c0_1, %c0_2] : memref<128x1024xbf16, #tpu.memory_space<vmem>>, vector<128x1024xbf16>
    %c0_3 = arith.constant 0 : index
    %c0_4 = arith.constant 0 : index
    %2 = vector.load %arg4[%c0_3, %c0_4] : memref<128x128xbf16, #tpu.memory_space<vmem>>, vector<128x128xbf16>
    %cst = arith.constant dense<0.000000e+00> : vector<8x128xf32>
    %3 = tpu.matmul %0, %1, %cst {dimension_numbers = #tpu.dot_dimension_numbers<[1], [1], [0], [0], [0, 0, 1, 0], [], []>} : vector<8x1024xbf16>, vector<128x1024xbf16>, vector<8x128xf32> -> vector<8x128xf32>
    %4 = arith.truncf %3 : vector<8x128xf32> to vector<8x128xbf16>
    %cst_5 = arith.constant dense<0.000000e+00> : vector<8x128xf32>
    %5 = tpu.matmul %4, %2, %cst_5 {dimension_numbers = #tpu.dot_dimension_numbers<[1], [1], [0], [0], [0, 0, 1, 0], [], []>} : vector<8x128xbf16>, vector<128x128xbf16>, vector<8x128xf32> -> vector<8x128xf32>
    %6 = arith.mulf %5, %5 : vector<8x128xf32>
    %cst_6 = arith.constant dense<0.000000e+00> : vector<8xf32>
    %7 = vector.multi_reduction <add>, %6, %cst_6 [1] : vector<8x128xf32> to vector<8xf32>
    %8 = vector.shape_cast %7 : vector<8xf32> to vector<8x1xf32>
    %cst_7 = arith.constant 1.000000e-24 : f32
    %9 = vector.broadcast %cst_7 : f32 to vector<8x1xf32>
    %10 = arith.maximumf %8, %9 : vector<8x1xf32>
    %11 = math.rsqrt %10 : vector<8x1xf32>
    %c0_8 = arith.constant 0 : index
    %c0_9 = arith.constant 0 : index
    %12 = vector.load %arg6[%c0_8, %c0_9] : memref<8x128xf32, #tpu.memory_space<vmem>>, vector<8x128xf32>
    tpu.vector_store %arg6[%c0_8, %c0_9], %3 {strides = array<i32>} : memref<8x128xf32, #tpu.memory_space<vmem>>, vector<8x128xf32>,
    %13 = vector.broadcast %11 : vector<8x1xf32> to vector<8x128xf32>
    %14 = arith.mulf %5, %13 : vector<8x128xf32>
    %c0_10 = arith.constant 0 : index
    %c0_11 = arith.constant 0 : index
    %15 = vector.load %arg8[%c0_10, %c0_11] : memref<8x128xf32, #tpu.memory_space<vmem>>, vector<8x128xf32>
    tpu.vector_store %arg8[%c0_10, %c0_11], %14 {strides = array<i32>} : memref<8x128xf32, #tpu.memory_space<vmem>>, vector<8x128xf32>,
    %c0_12 = arith.constant 0 : index
    %c0_13 = arith.constant 0 : index
    %16 = vector.load %arg1[%c0_12, %c0_13] : memref<8x256xbf16, #tpu.memory_space<vmem>>, vector<8x256xbf16>
    %c0_14 = arith.constant 0 : index
    %c0_15 = arith.constant 0 : index
    %17 = vector.load %arg3[%c0_14, %c0_15] : memref<128x256xbf16, #tpu.memory_space<vmem>>, vector<128x256xbf16>
    %c0_16 = arith.constant 0 : index
    %c0_17 = arith.constant 0 : index
    %18 = vector.load %arg5[%c0_16, %c0_17] : memref<128x128xbf16, #tpu.memory_space<vmem>>, vector<128x128xbf16>
    %cst_18 = arith.constant dense<0.000000e+00> : vector<8x128xf32>
    %19 = tpu.matmul %16, %17, %cst_18 {dimension_numbers = #tpu.dot_dimension_numbers<[1], [1], [0], [0], [0, 0, 1, 0], [], []>} : vector<8x256xbf16>, vector<128x256xbf16>, vector<8x128xf32> -> vector<8x128xf32>
    %20 = arith.truncf %19 : vector<8x128xf32> to vector<8x128xbf16>
    %cst_19 = arith.constant dense<0.000000e+00> : vector<8x128xf32>
    %21 = tpu.matmul %20, %18, %cst_19 {dimension_numbers = #tpu.dot_dimension_numbers<[1], [1], [0], [0], [0, 0, 1, 0], [], []>} : vector<8x128xbf16>, vector<128x128xbf16>, vector<8x128xf32> -> vector<8x128xf32>
    %22 = arith.mulf %21, %21 : vector<8x128xf32>
    %cst_20 = arith.constant dense<0.000000e+00> : vector<8xf32>
    %23 = vector.multi_reduction <add>, %22, %cst_20 [1] : vector<8x128xf32> to vector<8xf32>
    %24 = vector.shape_cast %23 : vector<8xf32> to vector<8x1xf32>
    %cst_21 = arith.constant 1.000000e-24 : f32
    %25 = vector.broadcast %cst_21 : f32 to vector<8x1xf32>
    %26 = arith.maximumf %24, %25 : vector<8x1xf32>
    %27 = math.rsqrt %26 : vector<8x1xf32>
    %c0_22 = arith.constant 0 : index
    %c0_23 = arith.constant 0 : index
    %28 = vector.load %arg7[%c0_22, %c0_23] : memref<8x128xf32, #tpu.memory_space<vmem>>, vector<8x128xf32>
    tpu.vector_store %arg7[%c0_22, %c0_23], %19 {strides = array<i32>} : memref<8x128xf32, #tpu.memory_space<vmem>>, vector<8x128xf32>,
    %29 = vector.broadcast %27 : vector<8x1xf32> to vector<8x128xf32>
    %30 = arith.mulf %21, %29 : vector<8x128xf32>
    %c0_24 = arith.constant 0 : index
    %c0_25 = arith.constant 0 : index
    %31 = vector.load %arg9[%c0_24, %c0_25] : memref<8x128xf32, #tpu.memory_space<vmem>>, vector<8x128xf32>
    tpu.vector_store %arg9[%c0_24, %c0_25], %30 {strides = array<i32>} : memref<8x128xf32, #tpu.memory_space<vmem>>, vector<8x128xf32>,
    return
  }
}

</mosaic_0001>

<llo_original>
// kernel: clip_forward.1
$region0: #{clip_forward.1}
  #allocation0 [shape = 'u32[]', space=smem, size = 0x4, offset = 0x4, fixed_abs, tag = 'smem constant byte address 0x4 - core index']
  #allocation1 [shape = 'u32[144,128]{1,0:T(1,128)}', space=vmem, size = 0x12000, scoped, tag = 'internal scratch']
  %s0 = inlined_call_operand.vmem [shape: bf16[8,1024], index: 0, kind: input, shape index: {}]
  %s1 = inlined_call_operand.vmem [shape: bf16[8,256], index: 1, kind: input, shape index: {}]
  %s2 = inlined_call_operand.hbm [shape: bf16[128,1024], index: 2, kind: input, shape index: {}]
  %s3 = inlined_call_operand.vmem [shape: bf16[128,256], index: 3, kind: input, shape index: {}]
  %s4 = inlined_call_operand.vmem [shape: bf16[128,128], index: 4, kind: input, shape index: {}]
  %s5 = inlined_call_operand.vmem [shape: bf16[128,128], index: 5, kind: input, shape index: {}]
  %s6 = inlined_call_operand.vmem [shape: f32[8,128], index: 6, kind: output, shape index: {0}]
  %s7 = inlined_call_operand.vmem [shape: f32[8,128], index: 7, kind: output, shape index: {1}]
  %s8 = inlined_call_operand.vmem [shape: f32[8,128], index: 8, kind: output, shape index: {2}]
  %s9 = inlined_call_operand.vmem [shape: f32[8,128], index: 9, kind: output, shape index: {3}]
  %10 = xla_tuple %s6, %s7, %s8, %s9
  %s11 = sld [smem:[#allocation0]]
  $region62: #{clip_forward.1} parent=0
    _
  %s13 = ssub.s32 1, %s11
  %s14 = scalar_select 0, %s13, %s11
  $region1: #{clip_forward.1} parent=0
    #allocation2 [shape = 'u8[262144]{0}', space=vmem, size = 0x40000, scoped, tag = 'input window, operand 2, single buffered']
    #allocation3 [shape = 's32[1]{0}', space=sflag, size = 0x4, scoped, tag = 'scoped memory for clip_forward.1']
    %15 = vsyncpa [#allocation3], 0
    // Predicated region
    $region2: #{clip_forward.1} parent=1 // pred_check
      _
    $region3: #{clip_forward.1} parent=1 // pred_check_branch
      %17 = sbr.rel (0) target = $region5
    $region4: #{clip_forward.1} parent=1 // pred_region
      _
    $region5: #{clip_forward.1} parent=1 // pred_fallthru
      _
    // Predicated region
    $region6: #{clip_forward.1} parent=1 // pred_check
      _
    $region7: #{clip_forward.1} parent=1 // pred_check_branch
      %19 = sbr.rel (0) target = $region9
    $region8: #{clip_forward.1} parent=1 // pred_region
      _
    $region9: #{clip_forward.1} parent=1 // pred_fallthru
      _
    // Predicated region
    $region10: #{clip_forward.1} parent=1 // pred_check
      _
    $region11: #{clip_forward.1} parent=1 // pred_check_branch
      %21 = sbr.rel (0) target = $region13
    $region12: #{clip_forward.1} parent=1 // pred_region
      %s23 = ssub.s32 8192, 8192
      %24 = vsyncadd [#allocation3], %s23
      %s25 = sshll.u32 [#allocation2], 4
      %s26 = int_to_ptr.vmem [resolvable:$true] %s25
      %31 = dma.hbm_to_vmem [thread:$0]  %s2, 8192, %s26, [#allocation3], 512, 512, 32
    $region13: #{clip_forward.1} parent=1 // pred_fallthru
      _
    // Predicated region
    $region14: #{clip_forward.1} parent=1 // pred_check
      _
    $region15: #{clip_forward.1} parent=1 // pred_check_branch
      %33 = sbr.rel (0) target = $region17
    $region16: #{clip_forward.1} parent=1 // pred_region
      _
    $region17: #{clip_forward.1} parent=1 // pred_fallthru
      _
    // Predicated region
    $region18: #{clip_forward.1} parent=1 // pred_check
      _
    $region19: #{clip_forward.1} parent=1 // pred_check_branch
      %35 = sbr.rel (0) target = $region21
    $region20: #{clip_forward.1} parent=1 // pred_region
      _
    $region21: #{clip_forward.1} parent=1 // pred_fallthru
      _
    // Predicated region
    $region22: #{clip_forward.1} parent=1 // pred_check
      _
    $region23: #{clip_forward.1} parent=1 // pred_check_branch
      %37 = sbr.rel (0) target = $region25
    $region24: #{clip_forward.1} parent=1 // pred_region
      _
    $region25: #{clip_forward.1} parent=1 // pred_fallthru
      _
    // Predicated region
    $region26: #{clip_forward.1} parent=1 // pred_check
      _
    $region27: #{clip_forward.1} parent=1 // pred_check_branch
      %39 = sbr.rel (0) target = $region29
    $region28: #{clip_forward.1} parent=1 // pred_region
      %40 = dma.done [#allocation3], 8192
    $region29: #{clip_forward.1} parent=1 // pred_fallthru
      _
    %v42 = vld [vmem:[%s0] sm:$0xff]
    %v43 = vld [vmem:[%s0 + $0x8] sm:$0xff]
    %v44 = vld [vmem:[%s0 + $0x10] sm:$0xff]
    %v45 = vld [vmem:[%s0 + $0x18] sm:$0xff]
    %v46 = vld [vmem:[#allocation2] sm:$0xff]
    %v47 = vld [vmem:[#allocation2 + $0x8] sm:$0xff]
    %v48 = vld [vmem:[#allocation2 + $0x10] sm:$0xff]
    %v49 = vld [vmem:[#allocation2 + $0x18] sm:$0xff]
    %v50 = vld [vmem:[#allocation2 + $0x20] sm:$0xff]
    %v51 = vld [vmem:[#allocation2 + $0x28] sm:$0xff]
    %v52 = vld [vmem:[#allocation2 + $0x30] sm:$0xff]
    %v53 = vld [vmem:[#allocation2 + $0x38] sm:$0xff]
    %v54 = vld [vmem:[#allocation2 + $0x40] sm:$0xff]
    %v55 = vld [vmem:[#allocation2 + $0x48] sm:$0xff]
    %v56 = vld [vmem:[#allocation2 + $0x50] sm:$0xff]
    %v57 = vld [vmem:[#allocation2 + $0x58] sm:$0xff]
    %v58 = vld [vmem:[#allocation2 + $0x60] sm:$0xff]
    %v59 = vld [vmem:[#allocation2 + $0x68] sm:$0xff]
    %v60 = vld [vmem:[#allocation2 + $0x70] sm:$0xff]
    %v61 = vld [vmem:[#allocation2 + $0x78] sm:$0xff]
    %v62 = vld [vmem:[#allocation2 + $0x80] sm:$0xff]
    %v63 = vld [vmem:[#allocation2 + $0x88] sm:$0xff]
    %v64 = vld [vmem:[#allocation2 + $0x90] sm:$0xff]
    %v65 = vld [vmem:[#allocation2 + $0x98] sm:$0xff]
    %v66 = vld [vmem:[#allocation2 + $0xa0] sm:$0xff]
    %v67 = vld [vmem:[#allocation2 + $0xa8] sm:$0xff]
    %v68 = vld [vmem:[#allocation2 + $0xb0] sm:$0xff]
    %v69 = vld [vmem:[#allocation2 + $0xb8] sm:$0xff]
    %v70 = vld [vmem:[#allocation2 + $0xc0] sm:$0xff]
    %v71 = vld [vmem:[#allocation2 + $0xc8] sm:$0xff]
    %v72 = vld [vmem:[#allocation2 + $0xd0] sm:$0xff]
    %v73 = vld [vmem:[#allocation2 + $0xd8] sm:$0xff]
    %v74 = vld [vmem:[#allocation2 + $0xe0] sm:$0xff]
    %v75 = vld [vmem:[#allocation2 + $0xe8] sm:$0xff]
    %v76 = vld [vmem:[#allocation2 + $0xf0] sm:$0xff]
    %v77 = vld [vmem:[#allocation2 + $0xf8] sm:$0xff]
    %v78 = vld [vmem:[#allocation2 + $0x100] sm:$0xff]
    %v79 = vld [vmem:[#allocation2 + $0x108] sm:$0xff]
    %v80 = vld [vmem:[#allocation2 + $0x110] sm:$0xff]
    %v81 = vld [vmem:[#allocation2 + $0x118] sm:$0xff]
    %v82 = vld [vmem:[#allocation2 + $0x120] sm:$0xff]
    %v83 = vld [vmem:[#allocation2 + $0x128] sm:$0xff]
    %v84 = vld [vmem:[#allocation2 + $0x130] sm:$0xff]
    %v85 = vld [vmem:[#allocation2 + $0x138] sm:$0xff]
    %v86 = vld [vmem:[#allocation2 + $0x140] sm:$0xff]
    %v87 = vld [vmem:[#allocation2 + $0x148] sm:$0xff]
    %v88 = vld [vmem:[#allocation2 + $0x150] sm:$0xff]
    %v89 = vld [vmem:[#allocation2 + $0x158] sm:$0xff]
    %v90 = vld [vmem:[#allocation2 + $0x160] sm:$0xff]
    %v91 = vld [vmem:[#allocation2 + $0x168] sm:$0xff]
    %v92 = vld [vmem:[#allocation2 + $0x170] sm:$0xff]
    %v93 = vld [vmem:[#allocation2 + $0x178] sm:$0xff]
    %v94 = vld [vmem:[#allocation2 + $0x180] sm:$0xff]
    %v95 = vld [vmem:[#allocation2 + $0x188] sm:$0xff]
    %v96 = vld [vmem:[#allocation2 + $0x190] sm:$0xff]
    %v97 = vld [vmem:[#allocation2 + $0x198] sm:$0xff]
    %v98 = vld [vmem:[#allocation2 + $0x1a0] sm:$0xff]
    %v99 = vld [vmem:[#allocation2 + $0x1a8] sm:$0xff]
    %v100 = vld [vmem:[#allocation2 + $0x1b0] sm:$0xff]
    %v101 = vld [vmem:[#allocation2 + $0x1b8] sm:$0xff]
    %v102 = vld [vmem:[#allocation2 + $0x1c0] sm:$0xff]
    %v103 = vld [vmem:[#allocation2 + $0x1c8] sm:$0xff]
    %v104 = vld [vmem:[#allocation2 + $0x1d0] sm:$0xff]
    %v105 = vld [vmem:[#allocation2 + $0x1d8] sm:$0xff]
    %v106 = vld [vmem:[#allocation2 + $0x1e0] sm:$0xff]
    %v107 = vld [vmem:[#allocation2 + $0x1e8] sm:$0xff]
    %v108 = vld [vmem:[#allocation2 + $0x1f0] sm:$0xff]
    %v109 = vld [vmem:[#allocation2 + $0x1f8] sm:$0xff]
    %v110 = vld [vmem:[%s4] sm:$0xf]
    %v111 = vld [vmem:[%s4 + $0x4] sm:$0xf]
    %v112 = vld [vmem:[%s4 + $0x8] sm:$0xf]
    %v113 = vld [vmem:[%s4 + $0xc] sm:$0xf]
    %v114 = vld [vmem:[%s4 + $0x10] sm:$0xf]
    %v115 = vld [vmem:[%s4 + $0x14] sm:$0xf]
    %v116 = vld [vmem:[%s4 + $0x18] sm:$0xf]
    %v117 = vld [vmem:[%s4 + $0x1c] sm:$0xf]
    %v118 = vld [vmem:[%s4 + $0x20] sm:$0xf]
    %v119 = vld [vmem:[%s4 + $0x24] sm:$0xf]
    %v120 = vld [vmem:[%s4 + $0x28] sm:$0xf]
    %v121 = vld [vmem:[%s4 + $0x2c] sm:$0xf]
    %v122 = vld [vmem:[%s4 + $0x30] sm:$0xf]
    %v123 = vld [vmem:[%s4 + $0x34] sm:$0xf]
    %v124 = vld [vmem:[%s4 + $0x38] sm:$0xf]
    %v125 = vld [vmem:[%s4 + $0x3c] sm:$0xf]
    %v130 = vunpack.c.l.b16 %v42
    %v131 = vunpack.c.h.b16 %v42
    %v132 = vunpack.c.l.b16 %v43
    %v133 = vunpack.c.h.b16 %v43
    %v134 = vunpack.c.l.b16 %v44
    %v135 = vunpack.c.h.b16 %v44
    %v136 = vunpack.c.l.b16 %v45
    %v137 = vunpack.c.h.b16 %v45
    %v138 = vpack.c.b16 %v130, %v130
    %v139 = vpack.c.b16 %v131, %v131
    %v140 = vpack.c.b16 %v132, %v132
    %v141 = vpack.c.b16 %v133, %v133
    %v142 = vpack.c.b16 %v134, %v134
    %v143 = vpack.c.b16 %v135, %v135
    %v144 = vpack.c.b16 %v136, %v136
    %v145 = vpack.c.b16 %v137, %v137
    %v218 = vunpack.c.l.b16 %v46
    %v219 = vunpack.c.h.b16 %v46
    %v220 = vunpack.c.l.b16 %v47
    %v221 = vunpack.c.h.b16 %v47
    %v222 = vunpack.c.l.b16 %v48
    %v223 = vunpack.c.h.b16 %v48
    %v224 = vunpack.c.l.b16 %v49
    %v225 = vunpack.c.h.b16 %v49
    %v226 = vunpack.c.l.b16 %v50
    %v227 = vunpack.c.h.b16 %v50
    %v228 = vunpack.c.l.b16 %v51
    %v229 = vunpack.c.h.b16 %v51
    %v230 = vunpack.c.l.b16 %v52
    %v231 = vunpack.c.h.b16 %v52
    %v232 = vunpack.c.l.b16 %v53
    %v233 = vunpack.c.h.b16 %v53
    %v234 = vunpack.c.l.b16 %v54
    %v235 = vunpack.c.h.b16 %v54
    %v236 = vunpack.c.l.b16 %v55
    %v237 = vunpack.c.h.b16 %v55
    %v238 = vunpack.c.l.b16 %v56
    %v239 = vunpack.c.h.b16 %v56
    %v240 = vunpack.c.l.b16 %v57
    %v241 = vunpack.c.h.b16 %v57
    %v242 = vunpack.c.l.b16 %v58
    %v243 = vunpack.c.h.b16 %v58
    %v244 = vunpack.c.l.b16 %v59
    %v245 = vunpack.c.h.b16 %v59
    %v246 = vunpack.c.l.b16 %v60
    %v247 = vunpack.c.h.b16 %v60
    %v248 = vunpack.c.l.b16 %v61
    %v249 = vunpack.c.h.b16 %v61
    %v250 = vunpack.c.l.b16 %v62
    %v251 = vunpack.c.h.b16 %v62
    %v252 = vunpack.c.l.b16 %v63
    %v253 = vunpack.c.h.b16 %v63
    %v254 = vunpack.c.l.b16 %v64
    %v255 = vunpack.c.h.b16 %v64
    %v256 = vunpack.c.l.b16 %v65
    %v257 = vunpack.c.h.b16 %v65
    %v258 = vunpack.c.l.b16 %v66
    %v259 = vunpack.c.h.b16 %v66
    %v260 = vunpack.c.l.b16 %v67
    %v261 = vunpack.c.h.b16 %v67
    %v262 = vunpack.c.l.b16 %v68
    %v263 = vunpack.c.h.b16 %v68
    %v264 = vunpack.c.l.b16 %v69
    %v265 = vunpack.c.h.b16 %v69
    %v266 = vunpack.c.l.b16 %v70
    %v267 = vunpack.c.h.b16 %v70
    %v268 = vunpack.c.l.b16 %v71
    %v269 = vunpack.c.h.b16 %v71
    %v270 = vunpack.c.l.b16 %v72
    %v271 = vunpack.c.h.b16 %v72
    %v272 = vunpack.c.l.b16 %v73
    %v273 = vunpack.c.h.b16 %v73
    %v274 = vunpack.c.l.b16 %v74
    %v275 = vunpack.c.h.b16 %v74
    %v276 = vunpack.c.l.b16 %v75
    %v277 = vunpack.c.h.b16 %v75
    %v278 = vunpack.c.l.b16 %v76
    %v279 = vunpack.c.h.b16 %v76
    %v280 = vunpack.c.l.b16 %v77
    %v281 = vunpack.c.h.b16 %v77
    %v282 = vunpack.c.l.b16 %v78
    %v283 = vunpack.c.h.b16 %v78
    %v284 = vunpack.c.l.b16 %v79
    %v285 = vunpack.c.h.b16 %v79
    %v286 = vunpack.c.l.b16 %v80
    %v287 = vunpack.c.h.b16 %v80
    %v288 = vunpack.c.l.b16 %v81
    %v289 = vunpack.c.h.b16 %v81
    %v290 = vunpack.c.l.b16 %v82
    %v291 = vunpack.c.h.b16 %v82
    %v292 = vunpack.c.l.b16 %v83
    %v293 = vunpack.c.h.b16 %v83
    %v294 = vunpack.c.l.b16 %v84
    %v295 = vunpack.c.h.b16 %v84
    %v296 = vunpack.c.l.b16 %v85
    %v297 = vunpack.c.h.b16 %v85
    %v298 = vunpack.c.l.b16 %v86
    %v299 = vunpack.c.h.b16 %v86
    %v300 = vunpack.c.l.b16 %v87
    %v301 = vunpack.c.h.b16 %v87
    %v302 = vunpack.c.l.b16 %v88
    %v303 = vunpack.c.h.b16 %v88
    %v304 = vunpack.c.l.b16 %v89
    %v305 = vunpack.c.h.b16 %v89
    %v306 = vunpack.c.l.b16 %v90
    %v307 = vunpack.c.h.b16 %v90
    %v308 = vunpack.c.l.b16 %v91
    %v309 = vunpack.c.h.b16 %v91
    %v310 = vunpack.c.l.b16 %v92
    %v311 = vunpack.c.h.b16 %v92
    %v312 = vunpack.c.l.b16 %v93
    %v313 = vunpack.c.h.b16 %v93
    %v314 = vunpack.c.l.b16 %v94
    %v315 = vunpack.c.h.b16 %v94
    %v316 = vunpack.c.l.b16 %v95
    %v317 = vunpack.c.h.b16 %v95
    %v318 = vunpack.c.l.b16 %v96
    %v319 = vunpack.c.h.b16 %v96
    %v320 = vunpack.c.l.b16 %v97
    %v321 = vunpack.c.h.b16 %v97
    %v322 = vunpack.c.l.b16 %v98
    %v323 = vunpack.c.h.b16 %v98
    %v324 = vunpack.c.l.b16 %v99
    %v325 = vunpack.c.h.b16 %v99
    %v326 = vunpack.c.l.b16 %v100
    %v327 = vunpack.c.h.b16 %v100
    %v328 = vunpack.c.l.b16 %v101
    %v329 = vunpack.c.h.b16 %v101
    %v330 = vunpack.c.l.b16 %v102
    %v331 = vunpack.c.h.b16 %v102
    %v332 = vunpack.c.l.b16 %v103
    %v333 = vunpack.c.h.b16 %v103
    %v334 = vunpack.c.l.b16 %v104
    %v335 = vunpack.c.h.b16 %v104
    %v336 = vunpack.c.l.b16 %v105
    %v337 = vunpack.c.h.b16 %v105
    %v338 = vunpack.c.l.b16 %v106
    %v339 = vunpack.c.h.b16 %v106
    %v340 = vunpack.c.l.b16 %v107
    %v341 = vunpack.c.h.b16 %v107
    %v342 = vunpack.c.l.b16 %v108
    %v343 = vunpack.c.h.b16 %v108
    %v344 = vunpack.c.l.b16 %v109
    %v345 = vunpack.c.h.b16 %v109
    %v346 = vpack.c.b16 %v226, %v218
    %v347 = vpack.c.b16 %v227, %v219
    %v348 = vpack.c.b16 %v228, %v220
    %v349 = vpack.c.b16 %v229, %v221
    %v350 = vpack.c.b16 %v230, %v222
    %v351 = vpack.c.b16 %v231, %v223
    %v352 = vpack.c.b16 %v232, %v224
    %v353 = vpack.c.b16 %v233, %v225
    %v354 = vpack.c.b16 %v242, %v234
    %v355 = vpack.c.b16 %v243, %v235
    %v356 = vpack.c.b16 %v244, %v236
    %v357 = vpack.c.b16 %v245, %v237
    %v358 = vpack.c.b16 %v246, %v238
    %v359 = vpack.c.b16 %v247, %v239
    %v360 = vpack.c.b16 %v248, %v240
    %v361 = vpack.c.b16 %v249, %v241
    %v362 = vpack.c.b16 %v258, %v250
    %v363 = vpack.c.b16 %v259, %v251
    %v364 = vpack.c.b16 %v260, %v252
    %v365 = vpack.c.b16 %v261, %v253
    %v366 = vpack.c.b16 %v262, %v254
    %v367 = vpack.c.b16 %v263, %v255
    %v368 = vpack.c.b16 %v264, %v256
    %v369 = vpack.c.b16 %v265, %v257
    %v370 = vpack.c.b16 %v274, %v266
    %v371 = vpack.c.b16 %v275, %v267
    %v372 = vpack.c.b16 %v276, %v268
    %v373 = vpack.c.b16 %v277, %v269
    %v374 = vpack.c.b16 %v278, %v270
    %v375 = vpack.c.b16 %v279, %v271
    %v376 = vpack.c.b16 %v280, %v272
    %v377 = vpack.c.b16 %v281, %v273
    %v378 = vpack.c.b16 %v290, %v282
    %v379 = vpack.c.b16 %v291, %v283
    %v380 = vpack.c.b16 %v292, %v284
    %v381 = vpack.c.b16 %v293, %v285
    %v382 = vpack.c.b16 %v294, %v286
    %v383 = vpack.c.b16 %v295, %v287
    %v384 = vpack.c.b16 %v296, %v288
    %v385 = vpack.c.b16 %v297, %v289
    %v386 = vpack.c.b16 %v306, %v298
    %v387 = vpack.c.b16 %v307, %v299
    %v388 = vpack.c.b16 %v308, %v300
    %v389 = vpack.c.b16 %v309, %v301
    %v390 = vpack.c.b16 %v310, %v302
    %v391 = vpack.c.b16 %v311, %v303
    %v392 = vpack.c.b16 %v312, %v304
    %v393 = vpack.c.b16 %v313, %v305
    %v394 = vpack.c.b16 %v322, %v314
    %v395 = vpack.c.b16 %v323, %v315
    %v396 = vpack.c.b16 %v324, %v316
    %v397 = vpack.c.b16 %v325, %v317
    %v398 = vpack.c.b16 %v326, %v318
    %v399 = vpack.c.b16 %v327, %v319
    %v400 = vpack.c.b16 %v328, %v320
    %v401 = vpack.c.b16 %v329, %v321
    %v402 = vpack.c.b16 %v338, %v330
    %v403 = vpack.c.b16 %v339, %v331
    %v404 = vpack.c.b16 %v340, %v332
    %v405 = vpack.c.b16 %v341, %v333
    %v406 = vpack.c.b16 %v342, %v334
    %v407 = vpack.c.b16 %v343, %v335
    %v408 = vpack.c.b16 %v344, %v336
    %v409 = vpack.c.b16 %v345, %v337
    %474 = vmatprep.subr.bf16.mxu0 %v403
    %475 = vmatpush1.bf16.xpose.msra.mxu0 %v402
    %476 = vmatprep.subr.bf16.mxu0 %v395
    %477 = vmatpush1.bf16.xpose.msra.mxu0 %v394
    %478 = vmatprep.subr.bf16.mxu0 %v387
    %479 = vmatpush1.bf16.xpose.msra.mxu0 %v386
    %480 = vmatprep.subr.bf16.mxu0 %v379
    %481 = vmatpush1.bf16.xpose.msra.mxu0 %v378
    %482 = vmatprep.subr.bf16.mxu0 %v371
    %483 = vmatpush1.bf16.xpose.msra.mxu0 %v370
    %484 = vmatprep.subr.bf16.mxu0 %v363
    %485 = vmatpush1.bf16.xpose.msra.mxu0 %v362
    %486 = vmatprep.subr.bf16.mxu0 %v355
    %487 = vmatpush1.bf16.xpose.msra.mxu0 %v354
    %488 = vmatprep.subr.bf16.mxu0 %v347
    %489 = vmatpush1.bf16.xpose.msra.mxu0 %v346
    %490 = vmatprep.subr.bf16.mxu0 0
    %491 = vmatpush2.bf16.xpose.msra.mxu0 0
    %492 = vmatprep.subr.bf16.mxu0 0
    %493 = vmatpush2.bf16.xpose.msra.mxu0 0
    %494 = vmatprep.subr.bf16.mxu0 0
    %495 = vmatpush2.bf16.xpose.msra.mxu0 0
    %496 = vmatprep.subr.bf16.mxu0 0
    %497 = vmatpush2.bf16.xpose.msra.mxu0 0
    %498 = vmatprep.subr.bf16.mxu0 0
    %499 = vmatpush2.bf16.xpose.msra.mxu0 0
    %500 = vmatprep.subr.bf16.mxu0 0
    %501 = vmatpush2.bf16.xpose.msra.mxu0 0
    %502 = vmatprep.subr.bf16.mxu0 0
    %503 = vmatpush2.bf16.xpose.msra.mxu0 0
    %504 = vmatprep.subr.bf16.mxu0 0
    %505 = vmatpush2.bf16.xpose.msra.mxu0 0
    %506 = vmatprep.mubr.bf16.mxu0 %v139
    %507 = vmatmul.mubr.bf16.gmra.mxu0 %v138
    %v508 = vpop.f32.mrf.mxu0
    %v509 = vadd.f32 0.0, %v508
    %v510 = vpop.f32.mrf.mxu0
    %v511 = vpop.f32.mrf.mxu0
    %v512 = vpop.f32.mrf.mxu0
    %513 = vdwg.mxu0
    %514 = vmatprep.subr.bf16.mxu0 %v405
    %515 = vmatpush1.bf16.xpose.msra.mxu0 %v404
    %516 = vmatprep.subr.bf16.mxu0 %v397
    %517 = vmatpush1.bf16.xpose.msra.mxu0 %v396
    %518 = vmatprep.subr.bf16.mxu0 %v389
    %519 = vmatpush1.bf16.xpose.msra.mxu0 %v388
    %520 = vmatprep.subr.bf16.mxu0 %v381
    %521 = vmatpush1.bf16.xpose.msra.mxu0 %v380
    %522 = vmatprep.subr.bf16.mxu0 %v373
    %523 = vmatpush1.bf16.xpose.msra.mxu0 %v372
    %524 = vmatprep.subr.bf16.mxu0 %v365
    %525 = vmatpush1.bf16.xpose.msra.mxu0 %v364
    %526 = vmatprep.subr.bf16.mxu0 %v357
    %527 = vmatpush1.bf16.xpose.msra.mxu0 %v356
    %528 = vmatprep.subr.bf16.mxu0 %v349
    %529 = vmatpush1.bf16.xpose.msra.mxu0 %v348
    %530 = vmatprep.subr.bf16.mxu0 0
    %531 = vmatpush2.bf16.xpose.msra.mxu0 0
    %532 = vmatprep.subr.bf16.mxu0 0
    %533 = vmatpush2.bf16.xpose.msra.mxu0 0
    %534 = vmatprep.subr.bf16.mxu0 0
    %535 = vmatpush2.bf16.xpose.msra.mxu0 0
    %536 = vmatprep.subr.bf16.mxu0 0
    %537 = vmatpush2.bf16.xpose.msra.mxu0 0
    %538 = vmatprep.subr.bf16.mxu0 0
    %539 = vmatpush2.bf16.xpose.msra.mxu0 0
    %540 = vmatprep.subr.bf16.mxu0 0
    %541 = vmatpush2.bf16.xpose.msra.mxu0 0
    %542 = vmatprep.subr.bf16.mxu0 0
    %543 = vmatpush2.bf16.xpose.msra.mxu0 0
    %544 = vmatprep.subr.bf16.mxu0 0
    %545 = vmatpush2.bf16.xpose.msra.mxu0 0
    %546 = vmatprep.mubr.bf16.mxu0 %v141
    %547 = vmatmul.mubr.bf16.gmra.mxu0 %v140
    %v548 = vpop.f32.mrf.mxu0
    %v549 = vadd.f32 %v509, %v548
    %v550 = vpop.f32.mrf.mxu0
    %v551 = vpop.f32.mrf.mxu0
    %v552 = vpop.f32.mrf.mxu0
    %553 = vdwg.mxu0
    %554 = vmatprep.subr.bf16.mxu0 %v407
    %555 = vmatpush1.bf16.xpose.msra.mxu0 %v406
    %556 = vmatprep.subr.bf16.mxu0 %v399
    %557 = vmatpush1.bf16.xpose.msra.mxu0 %v398
    %558 = vmatprep.subr.bf16.mxu0 %v391
    %559 = vmatpush1.bf16.xpose.msra.mxu0 %v390
    %560 = vmatprep.subr.bf16.mxu0 %v383
    %561 = vmatpush1.bf16.xpose.msra.mxu0 %v382
    %562 = vmatprep.subr.bf16.mxu0 %v375
    %563 = vmatpush1.bf16.xpose.msra.mxu0 %v374
    %564 = vmatprep.subr.bf16.mxu0 %v367
    %565 = vmatpush1.bf16.xpose.msra.mxu0 %v366
    %566 = vmatprep.subr.bf16.mxu0 %v359
    %567 = vmatpush1.bf16.xpose.msra.mxu0 %v358
    %568 = vmatprep.subr.bf16.mxu0 %v351
    %569 = vmatpush1.bf16.xpose.msra.mxu0 %v350
    %570 = vmatprep.subr.bf16.mxu0 0
    %571 = vmatpush2.bf16.xpose.msra.mxu0 0
    %572 = vmatprep.subr.bf16.mxu0 0
    %573 = vmatpush2.bf16.xpose.msra.mxu0 0
    %574 = vmatprep.subr.bf16.mxu0 0
    %575 = vmatpush2.bf16.xpose.msra.mxu0 0
    %576 = vmatprep.subr.bf16.mxu0 0
    %577 = vmatpush2.bf16.xpose.msra.mxu0 0
    %578 = vmatprep.subr.bf16.mxu0 0
    %579 = vmatpush2.bf16.xpose.msra.mxu0 0
    %580 = vmatprep.subr.bf16.mxu0 0
    %581 = vmatpush2.bf16.xpose.msra.mxu0 0
    %582 = vmatprep.subr.bf16.mxu0 0
    %583 = vmatpush2.bf16.xpose.msra.mxu0 0
    %584 = vmatprep.subr.bf16.mxu0 0
    %585 = vmatpush2.bf16.xpose.msra.mxu0 0
    %586 = vmatprep.mubr.bf16.mxu0 %v143
    %587 = vmatmul.mubr.bf16.gmra.mxu0 %v142
    %v588 = vpop.f32.mrf.mxu0
    %v589 = vadd.f32 %v549, %v588
    %v590 = vpop.f32.mrf.mxu0
    %v591 = vpop.f32.mrf.mxu0
    %v592 = vpop.f32.mrf.mxu0
    %593 = vdwg.mxu0
    %594 = vmatprep.subr.bf16.mxu0 %v409
    %595 = vmatpush1.bf16.xpose.msra.mxu0 %v408
    %596 = vmatprep.subr.bf16.mxu0 %v401
    %597 = vmatpush1.bf16.xpose.msra.mxu0 %v400
    %598 = vmatprep.subr.bf16.mxu0 %v393
    %599 = vmatpush1.bf16.xpose.msra.mxu0 %v392
    %600 = vmatprep.subr.bf16.mxu0 %v385
    %601 = vmatpush1.bf16.xpose.msra.mxu0 %v384
    %602 = vmatprep.subr.bf16.mxu0 %v377
    %603 = vmatpush1.bf16.xpose.msra.mxu0 %v376
    %604 = vmatprep.subr.bf16.mxu0 %v369
    %605 = vmatpush1.bf16.xpose.msra.mxu0 %v368
    %606 = vmatprep.subr.bf16.mxu0 %v361
    %607 = vmatpush1.bf16.xpose.msra.mxu0 %v360
    %608 = vmatprep.subr.bf16.mxu0 %v353
    %609 = vmatpush1.bf16.xpose.msra.mxu0 %v352
    %610 = vmatprep.subr.bf16.mxu0 0
    %611 = vmatpush2.bf16.xpose.msra.mxu0 0
    %612 = vmatprep.subr.bf16.mxu0 0
    %613 = vmatpush2.bf16.xpose.msra.mxu0 0
    %614 = vmatprep.subr.bf16.mxu0 0
    %615 = vmatpush2.bf16.xpose.msra.mxu0 0
    %616 = vmatprep.subr.bf16.mxu0 0
    %617 = vmatpush2.bf16.xpose.msra.mxu0 0
    %618 = vmatprep.subr.bf16.mxu0 0
    %619 = vmatpush2.bf16.xpose.msra.mxu0 0
    %620 = vmatprep.subr.bf16.mxu0 0
    %621 = vmatpush2.bf16.xpose.msra.mxu0 0
    %622 = vmatprep.subr.bf16.mxu0 0
    %623 = vmatpush2.bf16.xpose.msra.mxu0 0
    %624 = vmatprep.subr.bf16.mxu0 0
    %625 = vmatpush2.bf16.xpose.msra.mxu0 0
    %626 = vmatprep.mubr.bf16.mxu0 %v145
    %627 = vmatmul.mubr.bf16.gmra.mxu0 %v144
    %v628 = vpop.f32.mrf.mxu0
    %v629 = vadd.f32 %v589, %v628
    %v630 = vpop.f32.mrf.mxu0
    %v631 = vpop.f32.mrf.mxu0
    %v632 = vpop.f32.mrf.mxu0
    %633 = vdwg.mxu0
    %v634 = vpack.c.bf16 %v629, %v629
    %v651 = vunpack.c.l.b16 %v110
    %v652 = vunpack.c.l.b16 %v111
    %v653 = vunpack.c.l.b16 %v112
    %v654 = vunpack.c.l.b16 %v113
    %v655 = vunpack.c.l.b16 %v114
    %v656 = vunpack.c.l.b16 %v115
    %v657 = vunpack.c.l.b16 %v116
    %v658 = vunpack.c.l.b16 %v117
    %v659 = vunpack.c.l.b16 %v118
    %v660 = vunpack.c.l.b16 %v119
    %v661 = vunpack.c.l.b16 %v120
    %v662 = vunpack.c.l.b16 %v121
    %v663 = vunpack.c.l.b16 %v122
    %v664 = vunpack.c.l.b16 %v123
    %v665 = vunpack.c.l.b16 %v124
    %v666 = vunpack.c.l.b16 %v125
    %v667 = vpack.c.b16 %v652, %v651
    %v668 = vpack.c.b16 %v654, %v653
    %v669 = vpack.c.b16 %v656, %v655
    %v670 = vpack.c.b16 %v658, %v657
    %v671 = vpack.c.b16 %v660, %v659
    %v672 = vpack.c.b16 %v662, %v661
    %v673 = vpack.c.b16 %v664, %v663
    %v674 = vpack.c.b16 %v666, %v665
    %683 = vmatprep.subr.bf16.mxu0 0
    %684 = vmatpush1.bf16.xpose.msra.mxu0 %v674
    %685 = vmatprep.subr.bf16.mxu0 0
    %686 = vmatpush1.bf16.xpose.msra.mxu0 %v673
    %687 = vmatprep.subr.bf16.mxu0 0
    %688 = vmatpush1.bf16.xpose.msra.mxu0 %v672
    %689 = vmatprep.subr.bf16.mxu0 0
    %690 = vmatpush1.bf16.xpose.msra.mxu0 %v671
    %691 = vmatprep.subr.bf16.mxu0 0
    %692 = vmatpush1.bf16.xpose.msra.mxu0 %v670
    %693 = vmatprep.subr.bf16.mxu0 0
    %694 = vmatpush1.bf16.xpose.msra.mxu0 %v669
    %695 = vmatprep.subr.bf16.mxu0 0
    %696 = vmatpush1.bf16.xpose.msra.mxu0 %v668
    %697 = vmatprep.subr.bf16.mxu0 0
    %698 = vmatpush1.bf16.xpose.msra.mxu0 %v667
    %699 = vmatprep.subr.bf16.mxu0 0
    %700 = vmatpush2.bf16.xpose.msra.mxu0 0
    %701 = vmatprep.subr.bf16.mxu0 0
    %702 = vmatpush2.bf16.xpose.msra.mxu0 0
    %703 = vmatprep.subr.bf16.mxu0 0
    %704 = vmatpush2.bf16.xpose.msra.mxu0 0
    %705 = vmatprep.subr.bf16.mxu0 0
    %706 = vmatpush2.bf16.xpose.msra.mxu0 0
    %707 = vmatprep.subr.bf16.mxu0 0
    %708 = vmatpush2.bf16.xpose.msra.mxu0 0
    %709 = vmatprep.subr.bf16.mxu0 0
    %710 = vmatpush2.bf16.xpose.msra.mxu0 0
    %711 = vmatprep.subr.bf16.mxu0 0
    %712 = vmatpush2.bf16.xpose.msra.mxu0 0
    %713 = vmatprep.subr.bf16.mxu0 0
    %714 = vmatpush2.bf16.xpose.msra.mxu0 0
    %715 = vmatprep.mubr.bf16.mxu0 0
    %716 = vmatmul.mubr.bf16.gmra.mxu0 %v634
    %v717 = vpop.f32.mrf.mxu0
    %v718 = vadd.f32 0.0, %v717
    %v719 = vpop.f32.mrf.mxu0
    %v720 = vpop.f32.mrf.mxu0
    %v721 = vpop.f32.mrf.mxu0
    %722 = vdwg.mxu0
    %v723 = vmul.f32 %v718, %v718
    %724 = vadd.xlane.f32.xlu0 %v723
    %v725 = vpop.xlane.xlu0 %724
    %v726 = vmax.f32 %v725, 1e-24
    %v727 = vrsqrt.pop %v726
    %728 = vst [vmem:[%s6] sm:$0xff] %v629
    %v729 = vmul.f32 %v718, %v727
    %730 = vst [vmem:[%s8] sm:$0xff] %v729
    %v731 = vld [vmem:[%s1] sm:$0xff]
    %v732 = vld [vmem:[%s3] sm:$0xff]
    %v733 = vld [vmem:[%s3 + $0x8] sm:$0xff]
    %v734 = vld [vmem:[%s3 + $0x10] sm:$0xff]
    %v735 = vld [vmem:[%s3 + $0x18] sm:$0xff]
    %v736 = vld [vmem:[%s3 + $0x20] sm:$0xff]
    %v737 = vld [vmem:[%s3 + $0x28] sm:$0xff]
    %v738 = vld [vmem:[%s3 + $0x30] sm:$0xff]
    %v739 = vld [vmem:[%s3 + $0x38] sm:$0xff]
    %v740 = vld [vmem:[%s3 + $0x40] sm:$0xff]
    %v741 = vld [vmem:[%s3 + $0x48] sm:$0xff]
    %v742 = vld [vmem:[%s3 + $0x50] sm:$0xff]
    %v743 = vld [vmem:[%s3 + $0x58] sm:$0xff]
    %v744 = vld [vmem:[%s3 + $0x60] sm:$0xff]
    %v745 = vld [vmem:[%s3 + $0x68] sm:$0xff]
    %v746 = vld [vmem:[%s3 + $0x70] sm:$0xff]
    %v747 = vld [vmem:[%s3 + $0x78] sm:$0xff]
    %v748 = vld [vmem:[%s5] sm:$0xf]
    %v749 = vld [vmem:[%s5 + $0x4] sm:$0xf]
    %v750 = vld [vmem:[%s5 + $0x8] sm:$0xf]
    %v751 = vld [vmem:[%s5 + $0xc] sm:$0xf]
    %v752 = vld [vmem:[%s5 + $0x10] sm:$0xf]
    %v753 = vld [vmem:[%s5 + $0x14] sm:$0xf]
    %v754 = vld [vmem:[%s5 + $0x18] sm:$0xf]
    %v755 = vld [vmem:[%s5 + $0x1c] sm:$0xf]
    %v756 = vld [vmem:[%s5 + $0x20] sm:$0xf]
    %v757 = vld [vmem:[%s5 + $0x24] sm:$0xf]
    %v758 = vld [vmem:[%s5 + $0x28] sm:$0xf]
    %v759 = vld [vmem:[%s5 + $0x2c] sm:$0xf]
    %v760 = vld [vmem:[%s5 + $0x30] sm:$0xf]
    %v761 = vld [vmem:[%s5 + $0x34] sm:$0xf]
    %v762 = vld [vmem:[%s5 + $0x38] sm:$0xf]
    %v763 = vld [vmem:[%s5 + $0x3c] sm:$0xf]
    %v765 = vunpack.c.l.b16 %v731
    %v766 = vunpack.c.h.b16 %v731
    %v767 = vpack.c.b16 %v765, %v765
    %v768 = vpack.c.b16 %v766, %v766
    %v787 = vunpack.c.l.b16 %v732
    %v788 = vunpack.c.h.b16 %v732
    %v789 = vunpack.c.l.b16 %v733
    %v790 = vunpack.c.h.b16 %v733
    %v791 = vunpack.c.l.b16 %v734
    %v792 = vunpack.c.h.b16 %v734
    %v793 = vunpack.c.l.b16 %v735
    %v794 = vunpack.c.h.b16 %v735
    %v795 = vunpack.c.l.b16 %v736
    %v796 = vunpack.c.h.b16 %v736
    %v797 = vunpack.c.l.b16 %v737
    %v798 = vunpack.c.h.b16 %v737
    %v799 = vunpack.c.l.b16 %v738
    %v800 = vunpack.c.h.b16 %v738
    %v801 = vunpack.c.l.b16 %v739
    %v802 = vunpack.c.h.b16 %v739
    %v803 = vunpack.c.l.b16 %v740
    %v804 = vunpack.c.h.b16 %v740
    %v805 = vunpack.c.l.b16 %v741
    %v806 = vunpack.c.h.b16 %v741
    %v807 = vunpack.c.l.b16 %v742
    %v808 = vunpack.c.h.b16 %v742
    %v809 = vunpack.c.l.b16 %v743
    %v810 = vunpack.c.h.b16 %v743
    %v811 = vunpack.c.l.b16 %v744
    %v812 = vunpack.c.h.b16 %v744
    %v813 = vunpack.c.l.b16 %v745
    %v814 = vunpack.c.h.b16 %v745
    %v815 = vunpack.c.l.b16 %v746
    %v816 = vunpack.c.h.b16 %v746
    %v817 = vunpack.c.l.b16 %v747
    %v818 = vunpack.c.h.b16 %v747
    %v819 = vpack.c.b16 %v789, %v787
    %v820 = vpack.c.b16 %v790, %v788
    %v821 = vpack.c.b16 %v793, %v791
    %v822 = vpack.c.b16 %v794, %v792
    %v823 = vpack.c.b16 %v797, %v795
    %v824 = vpack.c.b16 %v798, %v796
    %v825 = vpack.c.b16 %v801, %v799
    %v826 = vpack.c.b16 %v802, %v800
    %v827 = vpack.c.b16 %v805, %v803
    %v828 = vpack.c.b16 %v806, %v804
    %v829 = vpack.c.b16 %v809, %v807
    %v830 = vpack.c.b16 %v810, %v808
    %v831 = vpack.c.b16 %v813, %v811
    %v832 = vpack.c.b16 %v814, %v812
    %v833 = vpack.c.b16 %v817, %v815
    %v834 = vpack.c.b16 %v818, %v816
    %851 = vmatprep.subr.bf16.mxu0 %v834
    %852 = vmatpush1.bf16.xpose.msra.mxu0 %v833
    %853 = vmatprep.subr.bf16.mxu0 %v832
    %854 = vmatpush1.bf16.xpose.msra.mxu0 %v831
    %855 = vmatprep.subr.bf16.mxu0 %v830
    %856 = vmatpush1.bf16.xpose.msra.mxu0 %v829
    %857 = vmatprep.subr.bf16.mxu0 %v828
    %858 = vmatpush1.bf16.xpose.msra.mxu0 %v827
    %859 = vmatprep.subr.bf16.mxu0 %v826
    %860 = vmatpush1.bf16.xpose.msra.mxu0 %v825
    %861 = vmatprep.subr.bf16.mxu0 %v824
    %862 = vmatpush1.bf16.xpose.msra.mxu0 %v823
    %863 = vmatprep.subr.bf16.mxu0 %v822
    %864 = vmatpush1.bf16.xpose.msra.mxu0 %v821
    %865 = vmatprep.subr.bf16.mxu0 %v820
    %866 = vmatpush1.bf16.xpose.msra.mxu0 %v819
    %867 = vmatprep.subr.bf16.mxu0 0
    %868 = vmatpush2.bf16.xpose.msra.mxu0 0
    %869 = vmatprep.subr.bf16.mxu0 0
    %870 = vmatpush2.bf16.xpose.msra.mxu0 0
    %871 = vmatprep.subr.bf16.mxu0 0
    %872 = vmatpush2.bf16.xpose.msra.mxu0 0
    %873 = vmatprep.subr.bf16.mxu0 0
    %874 = vmatpush2.bf16.xpose.msra.mxu0 0
    %875 = vmatprep.subr.bf16.mxu0 0
    %876 = vmatpush2.bf16.xpose.msra.mxu0 0
    %877 = vmatprep.subr.bf16.mxu0 0
    %878 = vmatpush2.bf16.xpose.msra.mxu0 0
    %879 = vmatprep.subr.bf16.mxu0 0
    %880 = vmatpush2.bf16.xpose.msra.mxu0 0
    %881 = vmatprep.subr.bf16.mxu0 0
    %882 = vmatpush2.bf16.xpose.msra.mxu0 0
    %883 = vmatprep.mubr.bf16.mxu0 %v768
    %884 = vmatmul.mubr.bf16.gmra.mxu0 %v767
    %v885 = vpop.f32.mrf.mxu0
    %v886 = vadd.f32 0.0, %v885
    %v887 = vpop.f32.mrf.mxu0
    %v888 = vpop.f32.mrf.mxu0
    %v889 = vpop.f32.mrf.mxu0
    %890 = vdwg.mxu0
    %v891 = vpack.c.bf16 %v886, %v886
    %v908 = vunpack.c.l.b16 %v748
    %v909 = vunpack.c.l.b16 %v749
    %v910 = vunpack.c.l.b16 %v750
    %v911 = vunpack.c.l.b16 %v751
    %v912 = vunpack.c.l.b16 %v752
    %v913 = vunpack.c.l.b16 %v753
    %v914 = vunpack.c.l.b16 %v754
    %v915 = vunpack.c.l.b16 %v755
    %v916 = vunpack.c.l.b16 %v756
    %v917 = vunpack.c.l.b16 %v757
    %v918 = vunpack.c.l.b16 %v758
    %v919 = vunpack.c.l.b16 %v759
    %v920 = vunpack.c.l.b16 %v760
    %v921 = vunpack.c.l.b16 %v761
    %v922 = vunpack.c.l.b16 %v762
    %v923 = vunpack.c.l.b16 %v763
    %v924 = vpack.c.b16 %v909, %v908
    %v925 = vpack.c.b16 %v911, %v910
    %v926 = vpack.c.b16 %v913, %v912
    %v927 = vpack.c.b16 %v915, %v914
    %v928 = vpack.c.b16 %v917, %v916
    %v929 = vpack.c.b16 %v919, %v918
    %v930 = vpack.c.b16 %v921, %v920
    %v931 = vpack.c.b16 %v923, %v922
    %940 = vmatprep.subr.bf16.mxu0 0
    %941 = vmatpush1.bf16.xpose.msra.mxu0 %v931
    %942 = vmatprep.subr.bf16.mxu0 0
    %943 = vmatpush1.bf16.xpose.msra.mxu0 %v930
    %944 = vmatprep.subr.bf16.mxu0 0
    %945 = vmatpush1.bf16.xpose.msra.mxu0 %v929
    %946 = vmatprep.subr.bf16.mxu0 0
    %947 = vmatpush1.bf16.xpose.msra.mxu0 %v928
    %948 = vmatprep.subr.bf16.mxu0 0
    %949 = vmatpush1.bf16.xpose.msra.mxu0 %v927
    %950 = vmatprep.subr.bf16.mxu0 0
    %951 = vmatpush1.bf16.xpose.msra.mxu0 %v926
    %952 = vmatprep.subr.bf16.mxu0 0
    %953 = vmatpush1.bf16.xpose.msra.mxu0 %v925
    %954 = vmatprep.subr.bf16.mxu0 0
    %955 = vmatpush1.bf16.xpose.msra.mxu0 %v924
    %956 = vmatprep.subr.bf16.mxu0 0
    %957 = vmatpush2.bf16.xpose.msra.mxu0 0
    %958 = vmatprep.subr.bf16.mxu0 0
    %959 = vmatpush2.bf16.xpose.msra.mxu0 0
    %960 = vmatprep.subr.bf16.mxu0 0
    %961 = vmatpush2.bf16.xpose.msra.mxu0 0
    %962 = vmatprep.subr.bf16.mxu0 0
    %963 = vmatpush2.bf16.xpose.msra.mxu0 0
    %964 = vmatprep.subr.bf16.mxu0 0
    %965 = vmatpush2.bf16.xpose.msra.mxu0 0
    %966 = vmatprep.subr.bf16.mxu0 0
    %967 = vmatpush2.bf16.xpose.msra.mxu0 0
    %968 = vmatprep.subr.bf16.mxu0 0
    %969 = vmatpush2.bf16.xpose.msra.mxu0 0
    %970 = vmatprep.subr.bf16.mxu0 0
    %971 = vmatpush2.bf16.xpose.msra.mxu0 0
    %972 = vmatprep.mubr.bf16.mxu0 0
    %973 = vmatmul.mubr.bf16.gmra.mxu0 %v891
    %v974 = vpop.f32.mrf.mxu0
    %v975 = vadd.f32 0.0, %v974
    %v976 = vpop.f32.mrf.mxu0
    %v977 = vpop.f32.mrf.mxu0
    %v978 = vpop.f32.mrf.mxu0
    %979 = vdwg.mxu0
    %v980 = vmul.f32 %v975, %v975
    %981 = vadd.xlane.f32.xlu0 %v980
    %v982 = vpop.xlane.xlu0 %981
    %v983 = vmax.f32 %v982, 1e-24
    %v984 = vrsqrt.pop %v983
    %985 = vst [vmem:[%s7] sm:$0xff] %v886
    %v986 = vmul.f32 %v975, %v984
    %987 = vst [vmem:[%s9] sm:$0xff] %v986
    // Predicated region
    $region30: #{clip_forward.1} parent=1 // pred_check
      _
    $region31: #{clip_forward.1} parent=1 // pred_check_branch
      %989 = sbr.rel (0) target = $region33
    $region32: #{clip_forward.1} parent=1 // pred_region
      _
    $region33: #{clip_forward.1} parent=1 // pred_fallthru
      _
    // Predicated region
    $region34: #{clip_forward.1} parent=1 // pred_check
      _
    $region35: #{clip_forward.1} parent=1 // pred_check_branch
      %991 = sbr.rel (0) target = $region37
    $region36: #{clip_forward.1} parent=1 // pred_region
      _
    $region37: #{clip_forward.1} parent=1 // pred_fallthru
      _
    // Predicated region
    $region38: #{clip_forward.1} parent=1 // pred_check
      _
    $region39: #{clip_forward.1} parent=1 // pred_check_branch
      %993 = sbr.rel (0) target = $region41
    $region40: #{clip_forward.1} parent=1 // pred_region
      _
    $region41: #{clip_forward.1} parent=1 // pred_fallthru
      _
    // Predicated region
    $region42: #{clip_forward.1} parent=1 // pred_check
      _
    $region43: #{clip_forward.1} parent=1 // pred_check_branch
      %995 = sbr.rel (0) target = $region45
    $region44: #{clip_forward.1} parent=1 // pred_region
      _
    $region45: #{clip_forward.1} parent=1 // pred_fallthru
      _
    // Predicated region
    $region46: #{clip_forward.1} parent=1 // pred_check
      _
    $region47: #{clip_forward.1} parent=1 // pred_check_branch
      %997 = sbr.rel (0) target = $region49
    $region48: #{clip_forward.1} parent=1 // pred_region
      _
    $region49: #{clip_forward.1} parent=1 // pred_fallthru
      _
    // Predicated region
    $region50: #{clip_forward.1} parent=1 // pred_check
      _
    $region51: #{clip_forward.1} parent=1 // pred_check_branch
      %999 = sbr.rel (0) target = $region53
    $region52: #{clip_forward.1} parent=1 // pred_region
      _
    $region53: #{clip_forward.1} parent=1 // pred_fallthru
      _
    // Predicated region
    $region54: #{clip_forward.1} parent=1 // pred_check
      _
    $region55: #{clip_forward.1} parent=1 // pred_check_branch
      %1001 = sbr.rel (0) target = $region57
    $region56: #{clip_forward.1} parent=1 // pred_region
      _
    $region57: #{clip_forward.1} parent=1 // pred_fallthru
      _
    // Predicated region
    $region58: #{clip_forward.1} parent=1 // pred_check
      _
    $region59: #{clip_forward.1} parent=1 // pred_check_branch
      %1003 = sbr.rel (0) target = $region61
    $region60: #{clip_forward.1} parent=1 // pred_region
      _
    $region61: #{clip_forward.1} parent=1 // pred_fallthru
      _
    %1004 = vsyncpa [#allocation3], 1

</llo_original>
